<compile_context>
chip_gen: v5e
topology: v5e:2x2
jax: 0.10.0
libtpu: 0.0.40
codegen_flags: <defaults>
</compile_context>

<pallas_src>
import math
from functools import partial

import jax
import jax.numpy as jnp
from jax import lax
from jax.experimental import pallas as pl
from jax.experimental.pallas import tpu as pltpu

_SMALL_S = 32  # below this, probs@V is done on the VPU, all f32.


# --------------------------------------------------------------------------
# Kernels
# --------------------------------------------------------------------------
def _attention_small_kernel(x_ref, w_ref, o_ref):
    """Single-shot path for small S (scores fully materialized, all f32)."""
    w = w_ref[...]                                    # (8, E) fused constants
    bq = w[7:8, 0:1]                                  # (1, 1) query bias (pre-scaled)
    bk = w[7:8, 1:2]                                  # (1, 1) key bias   (pre-scaled)

    bt = x_ref.shape[0]
    # Squeeze the batch dim when the block holds a single batch element.
    x = (x_ref[0] if bt == 1 else x_ref[...]).astype(jnp.float32)

    # Exactly one cos + one sin over the whole tile (EUP work cut ~1/3).
    cos_x = jnp.cos(x)
    sin_x = jnp.sin(x)

    # "quantum" value map surrogate: (.., S, E)
    V = cos_x * w[0:1, :] + sin_x * w[1:2, :] + w[2:3, :]
    # "quantum" query / key surrogates -> per-token scalars (.., S, 1).
    # 1/E and 1/sqrt(E)**0.5 scales are pre-folded into rows 3..6 / biases.
    Q = jnp.sum(cos_x * w[3:4, :] + sin_x * w[4:5, :], axis=-1, keepdims=True) + bq
    K = jnp.sum(cos_x * w[5:6, :] + sin_x * w[6:7, :], axis=-1, keepdims=True) + bk

    # scores = -(Q-K)^2 <= 0 (scale folded in), so exp is in (0, 1]: the
    # row-max subtraction is unnecessary (Q, K are O(1)-bounded by construction).
    diff = Q - jnp.swapaxes(K, -1, -2)                # (.., S, S)
    p = jnp.exp(-(diff * diff))
    inv_l = pl.reciprocal(jnp.sum(p, axis=-1, keepdims=True), approx=True)
    probs = p * inv_l

    # probs @ V as a VPU broadcast-FMA over keys: at S <= 32 a dot_general
    # would pad into a full 128/256-wide systolic tile (MXU ~all padding).
    S = probs.shape[-1]
    out = probs[..., :, 0:1] * V[..., 0:1, :]
    for j in range(1, S):
        out = out + probs[..., :, j:j + 1] * V[..., j:j + 1, :]

    if bt == 1:
        o_ref[0] = out.astype(o_ref.dtype)
    else:
        o_ref[...] = out.astype(o_ref.dtype)


def _attention_tiled_kernel(x_ref, w_ref, o_ref, v_scr, kt_scr,
                            *, num_k_tiles, tk, exp_dtype):
    """Key-tiled (flash-style) path: never materializes the full (S, S) scores.

    Because scores <= 0, no running max / rescale is needed: only the row sum
    l and the accumulator acc are carried across key tiles.
    """
    w = w_ref[...]
    bq = w[7:8, 0:1]
    bk = w[7:8, 1:2]

    bt = x_ref.shape[0]
    x = (x_ref[0] if bt == 1 else x_ref[...]).astype(jnp.float32)

    cos_x = jnp.cos(x)
    sin_x = jnp.sin(x)

    V = cos_x * w[0:1, :] + sin_x * w[1:2, :] + w[2:3, :]
    Q = jnp.sum(cos_x * w[3:4, :] + sin_x * w[4:5, :], axis=-1, keepdims=True) + bq
    K = jnp.sum(cos_x * w[5:6, :] + sin_x * w[6:7, :], axis=-1, keepdims=True) + bk

    # Stash V (bf16, MXU-ready) and K^T in VMEM scratch so key tiles can be
    # sliced with pl.ds inside the loop (no (S,S) temporaries ever live).
    if bt == 1:
        v_scr[0] = V.astype(v_scr.dtype)
        kt_scr[0] = jnp.swapaxes(K, -1, -2)            # (1, S)
    else:
        v_scr[...] = V.astype(v_scr.dtype)
        kt_scr[...] = jnp.swapaxes(K, -1, -2)          # (bt, 1, S)

    def body(j, carry):
        l, acc = carry
        start = pl.multiple_of(j * tk, tk)
        if bt == 1:
            k_t = kt_scr[0, :, pl.ds(start, tk)]       # (1, tk)
            v_t = v_scr[0, pl.ds(start, tk), :]        # (tk, E) bf16
        else:
            k_t = kt_scr[:, :, pl.ds(start, tk)]       # (bt, 1, tk)
            v_t = v_scr[:, pl.ds(start, tk), :]        # (bt, tk, E) bf16

        d = Q - k_t                                    # (.., S, tk)
        # bf16 exp on v6e/v7x (EUP bf16 path); f32 on v5e.  Scores <= 0.
        p = jnp.exp((-(d * d)).astype(exp_dtype))
        l = l + jnp.sum(p.astype(jnp.float32), axis=-1, keepdims=True)
        p_mx = p.astype(jnp.bfloat16)                  # bf16 MXU inputs, f32 acc
        if bt == 1:
            acc = acc + jnp.dot(p_mx, v_t, preferred_element_type=jnp.float32)
        else:
            acc = acc + jnp.einsum("bij,bjd->bid", p_mx, v_t,
                                   preferred_element_type=jnp.float32)
        return l, acc

    l0 = jnp.zeros(Q.shape, jnp.float32)
    acc0 = jnp.zeros(V.shape, jnp.float32)
    l, acc = lax.fori_loop(0, num_k_tiles, body, (l0, acc0))

    out = acc * pl.reciprocal(l, approx=True)
    if bt == 1:
        o_ref[0] = out.astype(o_ref.dtype)
    else:
        o_ref[...] = out.astype(o_ref.dtype)


# --------------------------------------------------------------------------
# Wrapper-side helpers
# --------------------------------------------------------------------------
def _fuse_weights(wv, wq, wk, E):
    """Fold all x-independent constants into one (8, E) array.

    cos(x + a) = cos(x)*cos(a) - sin(x)*sin(a), so per feature:
      V  = cos(x)*[cos(wv0)cos(wv1)] + sin(x)*[-sin(wv0)cos(wv1)] + sin(wv2)
      Qs = cos(x)*[cos(wq0)cos(wq1)wq2 * s/E] + sin(x)*[-sin(wq0)cos(wq1)wq2 * s/E]
    with s = E**-0.25 so that (Qs - Ks)^2 == (Q - K)^2 / sqrt(E) (softmax scale
    folded in).  Rows: 0..2 -> V, 3..4 -> Q, 5..6 -> K, 7 -> [bias_q*s, bias_k*s].
    """
    assert E >= 2, "need E >= 2 to pack the two biases into the last row"
    wv2 = wv.reshape(3, E).astype(jnp.float32)
    wq2 = wq[: 3 * E].reshape(3, E).astype(jnp.float32)
    wk2 = wk[: 3 * E].reshape(3, E).astype(jnp.float32)
    s = float(E) ** -0.25
    qscale = s / E

    cv_a = jnp.cos(wv2[0]) * jnp.cos(wv2[1])
    cv_b = -jnp.sin(wv2[0]) * jnp.cos(wv2[1])
    cv_c = jnp.sin(wv2[2])
    cq_a = jnp.cos(wq2[0]) * jnp.cos(wq2[1]) * wq2[2] * qscale
    cq_b = -jnp.sin(wq2[0]) * jnp.cos(wq2[1]) * wq2[2] * qscale
    ck_a = jnp.cos(wk2[0]) * jnp.cos(wk2[1]) * wk2[2] * qscale
    ck_b = -jnp.sin(wk2[0]) * jnp.cos(wk2[1]) * wk2[2] * qscale

    bias_row = (jnp.zeros((E,), jnp.float32)
                .at[0].set(wq[3 * E].astype(jnp.float32) * s)
                .at[1].set(wk[3 * E].astype(jnp.float32) * s))
    return jnp.stack([cv_a, cv_b, cv_c, cq_a, cq_b, ck_a, ck_b, bias_row], axis=0)


def _tpu_config():
    """Generation-aware knobs: #TensorCores, VMEM block budget / scoped limit,
    and whether the EUP has a bf16 path (v6e / v7x)."""
    kind = ""
    try:
        dev = jax.devices()[0]
        if dev.platform == "tpu":
            kind = dev.device_kind.lower()
    except Exception:
        pass
    if "v7" in kind:        # 2 TC, 64 MiB physical VMEM per TC
        return dict(num_tc=2, vmem_budget=36 << 20, vmem_limit=48 << 20, bf16_eup=True)
    if "v6" in kind:        # 1 TC, 128 MiB VMEM
        return dict(num_tc=1, vmem_budget=64 << 20, vmem_limit=96 << 20, bf16_eup=True)
    if "v5" in kind and ("lite" in kind or "v5e" in kind):   # v5e: 1 TC, 128 MiB
        return dict(num_tc=1, vmem_budget=64 << 20, vmem_limit=96 << 20, bf16_eup=False)
    # Unknown / older generation (v4, v5p, ...): conservative defaults, 2 TCs.
    return dict(num_tc=2, vmem_budget=24 << 20, vmem_limit=None, bf16_eup=False)


def _pick_k_tile(S):
    if S <= 512:
        return S
    for tk in (512, 256, 128):
        if S % tk == 0:
            return tk
    # TODO(synk): ragged S (> 512, not a multiple of 128) would need padded /
    # masked key tiles; fall back to a single full-width tile.
    return S


def _pick_block_batch(B, S, E, tk, num_tc, vmem_budget):
    """Batch elements per grid step.  Big blocks amortize the ~0.35 us
    per-grid-step overhead; on multi-TC chips keep >= 2 grid steps so
    dimension_semantics=('parallel',) can shard across cores."""
    sxe = S * E * 4
    per_b = (4 * sxe                        # x + out blocks, double-buffered by BlockSpec
             + 4 * sxe                      # cos/sin/V/acc f32 temporaries
             + S * 128 * 2 + 8 * S * 4      # V (bf16, lane-padded) + K^T scratch
             + 4 * S * tk * 4)              # diff/scores/exp/probs per key tile
    bt = max(1, min(B, int(vmem_budget) // max(per_b, 1)))
    if num_tc >= 2 and B >= 2:
        bt = min(bt, (B + 1) // 2)          # keep >= 2 grid steps only on multi-TC chips
    while B % bt:                           # exact division -> no padded partial blocks
        bt -= 1
    return bt


# --------------------------------------------------------------------------
# Public entry point
# --------------------------------------------------------------------------
def attention_head_hybrid2(x, wv, wq, wk, *, block_batch=None):
    """x: (B, S, E) f32; wv: (3E,); wq, wk: (3E+1,). Returns (B, S, E) f32."""
    B, S, E = x.shape
    cfg = _tpu_config()
    w = _fuse_weights(wv, wq, wk, E)
    tk = _pick_k_tile(S)

    if block_batch is not None:
        assert B % block_batch == 0, (
            f"block_batch={block_batch} must divide batch={B} "
            "(otherwise trailing batch rows would never be written)")
        bt = int(block_batch)
    else:
        bt = _pick_block_batch(B, S, E, tk, cfg["num_tc"], cfg["vmem_budget"])
    grid = (B // bt,)

    if S <= _SMALL_S:
        kernel = _attention_small_kernel
        scratch = []
    else:
        exp_dtype = jnp.bfloat16 if cfg["bf16_eup"] else jnp.float32
        kernel = partial(_attention_tiled_kernel,
                         num_k_tiles=S // tk, tk=tk, exp_dtype=exp_dtype)
        scratch = [pltpu.VMEM((bt, S, E), jnp.bfloat16),   # V (MXU-ready)
                   pltpu.VMEM((bt, 1, S), jnp.float32)]    # K^T

    cost = pl.CostEstimate(
        flops=int(2 * B * S * S * E + 10 * B * S * E),
        transcendentals=int(B * (2 * S * E + S * S)),
        bytes_accessed=int(8 * B * S * E),
    )

    return pl.pallas_call(
        kernel,
        out_shape=jax.ShapeDtypeStruct((B, S, E), jnp.float32),
        grid_spec=pltpu.PrefetchScalarGridSpec(
            num_scalar_prefetch=0,
            grid=grid,
            in_specs=[
                pl.BlockSpec((bt, S, E), lambda b: (b, 0, 0)),
                pl.BlockSpec((8, E), lambda b: (0, 0)),   # fused constants (one tile)
            ],
            out_specs=pl.BlockSpec((bt, S, E), lambda b: (b, 0, 0)),
            scratch_shapes=scratch,
        ),
        compiler_params=pltpu.CompilerParams(
            dimension_semantics=("parallel",),
            vmem_limit_bytes=cfg["vmem_limit"],
        ),
        cost_estimate=cost,
    )(x, w)


# --------------------------------------------------------------------------
# Pure-JAX reference (mirrors the PyTorch forward with the same surrogates)
# --------------------------------------------------------------------------
def _reference(x, wv, wq, wk):
    B, S, E = x.shape
    xf = x.reshape(B * S, E)
    wv2 = wv.reshape(3, E)
    wq2 = wq[: 3 * E].reshape(3, E)
    wk2 = wk[: 3 * E].reshape(3, E)

    V = (jnp.cos(xf + wv2[0]) * jnp.cos(wv2[1]) + jnp.sin(wv2[2])).reshape(B, S, E)
    Q = (jnp.sum(jnp.cos(xf + wq2[0]) * jnp.cos(wq2[1]) * wq2[2], axis=-1) / E
         + wq[3 * E]).reshape(B, S)
    K = (jnp.sum(jnp.cos(xf + wk2[0]) * jnp.cos(wk2[1]) * wk2[2], axis=-1) / E
         + wk[3 * E]).reshape(B, S)

    A = -(Q[:, :, None] - K[:, None, :]) ** 2
    probs = jax.nn.softmax(A / math.sqrt(E), axis=-1)
    return jnp.einsum("bij,bjd->bid", probs, V)


if __name__ == "__main__":
    B, S, E = 2, 8, 32   # batch, seq (Token_Dim), MultiHead_Embed_Dim
    key = jax.random.PRNGKey(0)
    k1, k2, k3, k4 = jax.random.split(key, 4)

    x = jax.random.normal(k1, (B, S, E), dtype=jnp.float32)
    wv = jax.random.uniform(k2, (3 * E,), dtype=jnp.float32,
                            minval=-math.pi, maxval=math.pi)
    wq = jax.random.uniform(k3, (3 * E + 1,), dtype=jnp.float32,
                            minval=-math.pi, maxval=math.pi)
    wk = jax.random.uniform(k4, (3 * E + 1,), dtype=jnp.float32,
                            minval=-math.pi, maxval=math.pi)

    out = attention_head_hybrid2(x, wv, wq, wk)
    jax.block_until_ready(out)

    ref = _reference(x, wv, wq, wk)
    assert out.shape == (B, S, E), out.shape
    # Tolerance relaxed vs. exact f32 only for the EUP approximate reciprocal
    # used to normalize the softmax (the small-S path is otherwise all f32).
    assert jnp.allclose(out, ref, atol=2e-3, rtol=2e-3), float(jnp.abs(out - ref).max())
    print("KERNEL_OK")
</pallas_src>

<mosaic_0001>
module attributes {stable_mosaic.version = 11 : i64} {
  func.func @_attention_small_kernel(%arg0: i32, %arg1: memref<1x8x32xf32, #tpu.memory_space<vmem>>, %arg2: memref<8x32xf32, #tpu.memory_space<vmem>>, %arg3: memref<1x8x32xf32, #tpu.memory_space<vmem>>) attributes {dimension_semantics = [#tpu.dimension_semantics<parallel>], iteration_bounds = array<i64: 2>, scalar_prefetch = 0 : i64, scratch_operands = 0 : i64, tpu.core_type = #tpu.core_type<tc>, window_params = [{transform_indices = @transform_0, window_bounds = array<i64: 1, 8, 32>}, {pipeline_mode = #tpu.pipeline_mode<synchronous>, transform_indices = @transform_1, window_bounds = array<i64: 8, 32>}, {transform_indices = @transform_2, window_bounds = array<i64: 1, 8, 32>}]} {
    %c0 = arith.constant 0 : index
    %c0_0 = arith.constant 0 : index
    %0 = vector.load %arg2[%c0, %c0_0] : memref<8x32xf32, #tpu.memory_space<vmem>>, vector<8x32xf32>
    %1 = vector.extract_strided_slice %0 {offsets = [7, 0], sizes = [1, 1], strides = [1, 1]} : vector<8x32xf32> to vector<1x1xf32>
    %2 = vector.extract_strided_slice %0 {offsets = [7, 1], sizes = [1, 1], strides = [1, 1]} : vector<8x32xf32> to vector<1x1xf32>
    %c0_1 = arith.constant 0 : index
    %c0_2 = arith.constant 0 : index
    %c0_3 = arith.constant 0 : index
    %3 = vector.load %arg1[%c0_1, %c0_2, %c0_3] : memref<1x8x32xf32, #tpu.memory_space<vmem>>, vector<1x8x32xf32>
    %4 = vector.shape_cast %3 : vector<1x8x32xf32> to vector<8x32xf32>
    %5 = math.cos %4 : vector<8x32xf32>
    %6 = math.sin %4 : vector<8x32xf32>
    %7 = vector.extract_strided_slice %0 {offsets = [0, 0], sizes = [1, 32], strides = [1, 1]} : vector<8x32xf32> to vector<1x32xf32>
    %8 = vector.broadcast %7 : vector<1x32xf32> to vector<8x32xf32>
    %9 = arith.mulf %5, %8 : vector<8x32xf32>
    %10 = vector.extract_strided_slice %0 {offsets = [1, 0], sizes = [1, 32], strides = [1, 1]} : vector<8x32xf32> to vector<1x32xf32>
    %11 = vector.broadcast %10 : vector<1x32xf32> to vector<8x32xf32>
    %12 = arith.mulf %6, %11 : vector<8x32xf32>
    %13 = arith.addf %9, %12 : vector<8x32xf32>
    %14 = vector.extract_strided_slice %0 {offsets = [2, 0], sizes = [1, 32], strides = [1, 1]} : vector<8x32xf32> to vector<1x32xf32>
    %15 = vector.broadcast %14 : vector<1x32xf32> to vector<8x32xf32>
    %16 = arith.addf %13, %15 : vector<8x32xf32>
    %17 = vector.extract_strided_slice %0 {offsets = [3, 0], sizes = [1, 32], strides = [1, 1]} : vector<8x32xf32> to vector<1x32xf32>
    %18 = vector.broadcast %17 : vector<1x32xf32> to vector<8x32xf32>
    %19 = arith.mulf %5, %18 : vector<8x32xf32>
    %20 = vector.extract_strided_slice %0 {offsets = [4, 0], sizes = [1, 32], strides = [1, 1]} : vector<8x32xf32> to vector<1x32xf32>
    %21 = vector.broadcast %20 : vector<1x32xf32> to vector<8x32xf32>
    %22 = arith.mulf %6, %21 : vector<8x32xf32>
    %23 = arith.addf %19, %22 : vector<8x32xf32>
    %cst = arith.constant dense<0.000000e+00> : vector<8xf32>
    %24 = vector.multi_reduction <add>, %23, %cst [1] : vector<8x32xf32> to vector<8xf32>
    %25 = vector.shape_cast %24 : vector<8xf32> to vector<8x1xf32>
    %26 = vector.broadcast %1 : vector<1x1xf32> to vector<8x1xf32>
    %27 = arith.addf %25, %26 : vector<8x1xf32>
    %28 = vector.extract_strided_slice %0 {offsets = [5, 0], sizes = [1, 32], strides = [1, 1]} : vector<8x32xf32> to vector<1x32xf32>
    %29 = vector.broadcast %28 : vector<1x32xf32> to vector<8x32xf32>
    %30 = arith.mulf %5, %29 : vector<8x32xf32>
    %31 = vector.extract_strided_slice %0 {offsets = [6, 0], sizes = [1, 32], strides = [1, 1]} : vector<8x32xf32> to vector<1x32xf32>
    %32 = vector.broadcast %31 : vector<1x32xf32> to vector<8x32xf32>
    %33 = arith.mulf %6, %32 : vector<8x32xf32>
    %34 = arith.addf %30, %33 : vector<8x32xf32>
    %cst_4 = arith.constant dense<0.000000e+00> : vector<8xf32>
    %35 = vector.multi_reduction <add>, %34, %cst_4 [1] : vector<8x32xf32> to vector<8xf32>
    %36 = vector.shape_cast %35 : vector<8xf32> to vector<8x1xf32>
    %37 = vector.broadcast %2 : vector<1x1xf32> to vector<8x1xf32>
    %38 = arith.addf %36, %37 : vector<8x1xf32>
    %39 = tpu.transpose %38, [1, 0] : vector<8x1xf32> -> vector<1x8xf32>
    %40 = vector.broadcast %27 : vector<8x1xf32> to vector<8x8xf32>
    %41 = vector.broadcast %39 : vector<1x8xf32> to vector<8x8xf32>
    %42 = arith.subf %40, %41 : vector<8x8xf32>
    %43 = arith.mulf %42, %42 : vector<8x8xf32>
    %cst_5 = arith.constant 0.000000e+00 : f32
    %44 = vector.broadcast %cst_5 : f32 to vector<8x8xf32>
    %45 = arith.subf %44, %43 : vector<8x8xf32>
    %46 = math.exp %45 : vector<8x8xf32>
    %cst_6 = arith.constant dense<0.000000e+00> : vector<8xf32>
    %47 = vector.multi_reduction <add>, %46, %cst_6 [1] : vector<8x8xf32> to vector<8xf32>
    %48 = vector.shape_cast %47 : vector<8xf32> to vector<8x1xf32>
    %49 = tpu.reciprocal %48 {approx = true} : vector<8x1xf32> -> vector<8x1xf32>
    %50 = vector.broadcast %49 : vector<8x1xf32> to vector<8x8xf32>
    %51 = arith.mulf %46, %50 : vector<8x8xf32>
    %52 = vector.extract_strided_slice %51 {offsets = [0, 0], sizes = [8, 1], strides = [1, 1]} : vector<8x8xf32> to vector<8x1xf32>
    %53 = vector.extract_strided_slice %16 {offsets = [0, 0], sizes = [1, 32], strides = [1, 1]} : vector<8x32xf32> to vector<1x32xf32>
    %54 = vector.broadcast %52 : vector<8x1xf32> to vector<8x32xf32>
    %55 = vector.broadcast %53 : vector<1x32xf32> to vector<8x32xf32>
    %56 = arith.mulf %54, %55 : vector<8x32xf32>
    %57 = vector.extract_strided_slice %51 {offsets = [0, 1], sizes = [8, 1], strides = [1, 1]} : vector<8x8xf32> to vector<8x1xf32>
    %58 = vector.extract_strided_slice %16 {offsets = [1, 0], sizes = [1, 32], strides = [1, 1]} : vector<8x32xf32> to vector<1x32xf32>
    %59 = vector.broadcast %57 : vector<8x1xf32> to vector<8x32xf32>
    %60 = vector.broadcast %58 : vector<1x32xf32> to vector<8x32xf32>
    %61 = arith.mulf %59, %60 : vector<8x32xf32>
    %62 = arith.addf %56, %61 : vector<8x32xf32>
    %63 = vector.extract_strided_slice %51 {offsets = [0, 2], sizes = [8, 1], strides = [1, 1]} : vector<8x8xf32> to vector<8x1xf32>
    %64 = vector.extract_strided_slice %16 {offsets = [2, 0], sizes = [1, 32], strides = [1, 1]} : vector<8x32xf32> to vector<1x32xf32>
    %65 = vector.broadcast %63 : vector<8x1xf32> to vector<8x32xf32>
    %66 = vector.broadcast %64 : vector<1x32xf32> to vector<8x32xf32>
    %67 = arith.mulf %65, %66 : vector<8x32xf32>
    %68 = arith.addf %62, %67 : vector<8x32xf32>
    %69 = vector.extract_strided_slice %51 {offsets = [0, 3], sizes = [8, 1], strides = [1, 1]} : vector<8x8xf32> to vector<8x1xf32>
    %70 = vector.extract_strided_slice %16 {offsets = [3, 0], sizes = [1, 32], strides = [1, 1]} : vector<8x32xf32> to vector<1x32xf32>
    %71 = vector.broadcast %69 : vector<8x1xf32> to vector<8x32xf32>
    %72 = vector.broadcast %70 : vector<1x32xf32> to vector<8x32xf32>
    %73 = arith.mulf %71, %72 : vector<8x32xf32>
    %74 = arith.addf %68, %73 : vector<8x32xf32>
    %75 = vector.extract_strided_slice %51 {offsets = [0, 4], sizes = [8, 1], strides = [1, 1]} : vector<8x8xf32> to vector<8x1xf32>
    %76 = vector.extract_strided_slice %16 {offsets = [4, 0], sizes = [1, 32], strides = [1, 1]} : vector<8x32xf32> to vector<1x32xf32>
    %77 = vector.broadcast %75 : vector<8x1xf32> to vector<8x32xf32>
    %78 = vector.broadcast %76 : vector<1x32xf32> to vector<8x32xf32>
    %79 = arith.mulf %77, %78 : vector<8x32xf32>
    %80 = arith.addf %74, %79 : vector<8x32xf32>
    %81 = vector.extract_strided_slice %51 {offsets = [0, 5], sizes = [8, 1], strides = [1, 1]} : vector<8x8xf32> to vector<8x1xf32>
    %82 = vector.extract_strided_slice %16 {offsets = [5, 0], sizes = [1, 32], strides = [1, 1]} : vector<8x32xf32> to vector<1x32xf32>
    %83 = vector.broadcast %81 : vector<8x1xf32> to vector<8x32xf32>
    %84 = vector.broadcast %82 : vector<1x32xf32> to vector<8x32xf32>
    %85 = arith.mulf %83, %84 : vector<8x32xf32>
    %86 = arith.addf %80, %85 : vector<8x32xf32>
    %87 = vector.extract_strided_slice %51 {offsets = [0, 6], sizes = [8, 1], strides = [1, 1]} : vector<8x8xf32> to vector<8x1xf32>
    %88 = vector.extract_strided_slice %16 {offsets = [6, 0], sizes = [1, 32], strides = [1, 1]} : vector<8x32xf32> to vector<1x32xf32>
    %89 = vector.broadcast %87 : vector<8x1xf32> to vector<8x32xf32>
    %90 = vector.broadcast %88 : vector<1x32xf32> to vector<8x32xf32>
    %91 = arith.mulf %89, %90 : vector<8x32xf32>
    %92 = arith.addf %86, %91 : vector<8x32xf32>
    %93 = vector.extract_strided_slice %51 {offsets = [0, 7], sizes = [8, 1], strides = [1, 1]} : vector<8x8xf32> to vector<8x1xf32>
    %94 = vector.extract_strided_slice %16 {offsets = [7, 0], sizes = [1, 32], strides = [1, 1]} : vector<8x32xf32> to vector<1x32xf32>
    %95 = vector.broadcast %93 : vector<8x1xf32> to vector<8x32xf32>
    %96 = vector.broadcast %94 : vector<1x32xf32> to vector<8x32xf32>
    %97 = arith.mulf %95, %96 : vector<8x32xf32>
    %98 = arith.addf %92, %97 : vector<8x32xf32>
    %c0_7 = arith.constant 0 : index
    %c0_8 = arith.constant 0 : index
    %c0_9 = arith.constant 0 : index
    %99 = vector.load %arg3[%c0_7, %c0_8, %c0_9] : memref<1x8x32xf32, #tpu.memory_space<vmem>>, vector<1x8x32xf32>
    %100 = vector.shape_cast %99 : vector<1x8x32xf32> to vector<8x32xf32>
    %101 = vector.shape_cast %98 : vector<8x32xf32> to vector<1x8x32xf32>
    tpu.vector_store %arg3[%c0_7, %c0_8, %c0_9], %101 {strides = array<i32>} : memref<1x8x32xf32, #tpu.memory_space<vmem>>, vector<1x8x32xf32>,
    return
  }
  func.func @transform_0(%arg0: i32) -> (i32, i32, i32) {
    %c0_i32 = arith.constant 0 : i32
    %c0_i32_0 = arith.constant 0 : i32
    %c0_i32_1 = arith.constant 0 : i32
    return %arg0, %c0_i32, %c0_i32_0 : i32, i32, i32
  }
  func.func @transform_1(%arg0: i32) -> (i32, i32) {
    %c0_i32 = arith.constant 0 : i32
    %c0_i32_0 = arith.constant 0 : i32
    %c0_i32_1 = arith.constant 0 : i32
    return %c0_i32, %c0_i32_0 : i32, i32
  }
  func.func @transform_2(%arg0: i32) -> (i32, i32, i32) {
    %c0_i32 = arith.constant 0 : i32
    %c0_i32_0 = arith.constant 0 : i32
    %c0_i32_1 = arith.constant 0 : i32
    return %arg0, %c0_i32, %c0_i32_0 : i32, i32, i32
  }
}

</mosaic_0001>

<llo_original>
// kernel: tpu_custom_call.1
$region0: #{tpu_custom_call.1}
  #allocation0 [shape = 'u32[]', space=smem, size = 0x4, offset = 0x4, fixed_abs, tag = 'smem constant byte address 0x4 - core index']
  #allocation1 [shape = 'u32[72,128]{1,0:T(1,128)}', space=vmem, size = 0x9000, scoped, tag = 'internal scratch']
  %s0 = inlined_call_operand.hbm [shape: f32[2,8,32], index: 0, kind: input, shape index: {}]
  %s1 = inlined_call_operand.hbm [shape: f32[8,32], index: 1, kind: input, shape index: {}]
  %s2 = inlined_call_operand.hbm [shape: f32[2,8,32], index: 2, kind: output, shape index: {}]
  %s3 = sld [smem:[#allocation0]]
  $region49: #{tpu_custom_call.1} parent=0
    _
  %s5 = ssub.s32 1, %s3
  %s6 = scalar_select 0, %s5, %s3
  $region1: #{tpu_custom_call.1} parent=0
    #allocation2 [shape = 'u8[8192]{0}', space=vmem, size = 0x2000, scoped, tag = 'input window, operand 0']
    #allocation3 [shape = 's32[2]{0}', space=sflag, size = 0x8, scoped, tag = 'scoped memory for tpu_custom_call.1']
    #allocation4 [shape = 's32[2]{0}', space=sflag, size = 0x8, scoped, tag = 'scoped memory for tpu_custom_call.1']
    #allocation5 [shape = 'u8[4096]{0}', space=vmem, size = 0x1000, scoped, tag = 'input window, operand 1, single buffered']
    #allocation6 [shape = 's32[1]{0}', space=sflag, size = 0x4, scoped, tag = 'scoped memory for tpu_custom_call.1']
    #allocation7 [shape = 'u8[8192]{0}', space=vmem, size = 0x2000, scoped, tag = 'output window, operand 0']
    %7 = vsyncpa [#allocation3], 0
    %s8 = scalar_lea.sflag [#allocation3], 1
    %9 = vsyncpa %s8, 0
    %10 = vsyncpa [#allocation6], 0
    %11 = vsyncpa [#allocation4], 0
    %s12 = scalar_lea.sflag [#allocation4], 1
    %13 = vsyncpa %s12, 0
    loop: start=0, step=1, limit=4
    $region2: #{tpu_custom_call.1} parent=1 // loop_pre_header
      _
    $region3: #{tpu_custom_call.1} parent=1 // loop_header
      %s15 = sphi 0, %s19
      %p16 = scmp.ge.s32.totalorder %s15, 4
      %s25 = sphi 0, %s27
      %s28 = sphi 0, %s25
      %s29 = sphi 0, %s28
      %s45 = sphi 0, %s29
      %s49 = sphi 0, %s49
      %s51 = sphi 0, %s49
      %s52 = sphi 0, %s51
      %s66 = sphi 0, %s52
      %s72 = sphi 0, %s74
      %s75 = sphi 0, %s72
      %s76 = sphi 0, %s75
      %s92 = sphi 0, %s76
    $region4: #{tpu_custom_call.1} parent=1 // loop_header_branch
      %18 = sbr.rel (%p16) target = $region8
    $region5: #{tpu_custom_call.1} parent=1 // loop_body
      %s20 = ssub.s32 %s15, 1
      %s21 = ssub.s32 %s15, 2
      %s22 = sadd.s32 %s15, 1
      %s23 = ssub.s32 %s15, %s22
      %p24 = scmp.eq.s32.totalorder %s23, 0
      %s26 = sadd.s32 %s25, 1
      %s27 = scalar_select %p24, %s25, %s26
      %p30 = pneg %p24
      %p31 = scmp.eq.s32.totalorder %s15, 1
      %p32 = por %p30, %p31
      %p33 = scmp.ne.s32.totalorder %s25, %s28
      %p34 = scmp.eq.s32.totalorder %s15, 0
      %p35 = por %p33, %p34
      %p36 = scmp.ne.s32.totalorder %s25, %s28
      %p37 = scmp.eq.s32.totalorder %s20, 1
      %p38 = por %p36, %p37
      %p39 = scmp.ne.s32.totalorder %s28, %s29
      %p40 = scmp.eq.s32.totalorder %s20, 0
      %p41 = por %p39, %p40
      %p42 = scmp.ne.s32.totalorder %s28, %s29
      %p43 = scmp.eq.s32.totalorder %s21, 1
      %p44 = por %p42, %p43
      %p46 = scmp.ne.s32.totalorder %s29, %s45
      %p47 = scmp.eq.s32.totalorder %s21, 0
      %p48 = por %p46, %p47
      %s50 = sadd.s32 %s49, 1
      %p53 = scmp.eq.s32.totalorder %s15, 1
      %p54 = scmp.ne.s32.totalorder %s49, %s51
      %p55 = scmp.eq.s32.totalorder %s15, 0
      %p56 = por %p54, %p55
      %p57 = scmp.ne.s32.totalorder %s49, %s51
      %p58 = scmp.eq.s32.totalorder %s20, 1
      %p59 = por %p57, %p58
      %p60 = scmp.ne.s32.totalorder %s51, %s52
      %p61 = scmp.eq.s32.totalorder %s20, 0
      %p62 = por %p60, %p61
      %p63 = scmp.ne.s32.totalorder %s51, %s52
      %p64 = scmp.eq.s32.totalorder %s21, 1
      %p65 = por %p63, %p64
      %p67 = scmp.ne.s32.totalorder %s52, %s66
      %p68 = scmp.eq.s32.totalorder %s21, 0
      %p69 = por %p67, %p68
      %s70 = ssub.s32 %s15, %s22
      %p71 = scmp.eq.s32.totalorder %s70, 0
      %s73 = sadd.s32 %s72, 1
      %s74 = scalar_select %p71, %s72, %s73
      %p77 = pneg %p71
      %p78 = scmp.eq.s32.totalorder %s15, 1
      %p79 = por %p77, %p78
      %p80 = scmp.ne.s32.totalorder %s72, %s75
      %p81 = scmp.eq.s32.totalorder %s15, 0
      %p82 = por %p80, %p81
      %p83 = scmp.ne.s32.totalorder %s72, %s75
      %p84 = scmp.eq.s32.totalorder %s20, 1
      %p85 = por %p83, %p84
      %p86 = scmp.ne.s32.totalorder %s75, %s76
      %p87 = scmp.eq.s32.totalorder %s20, 0
      %p88 = por %p86, %p87
      %p89 = scmp.ne.s32.totalorder %s75, %s76
      %p90 = scmp.eq.s32.totalorder %s21, 1
      %p91 = por %p89, %p90
      %p93 = scmp.ne.s32.totalorder %s76, %s92
      %p94 = scmp.eq.s32.totalorder %s21, 0
      %p95 = por %p93, %p94
      %p96 = scmp.le.s32.totalorder 1, %s15
      %p97 = scmp.lt.s32.totalorder %s15, 3
      %p98 = pnand %p96, %p97
      %p99 = pneg %p98
      // Predicated region
      $region9: #{tpu_custom_call.1} parent=5 // pred_check
        _
      $region10: #{tpu_custom_call.1} parent=5 // pred_check_branch
        %101 = sbr.rel (%p98) target = $region12
      $region11: #{tpu_custom_call.1} parent=5 // pred_region
        %s102 = ssub.s32 %s15, 1
        // Predicated region
        $region13: #{tpu_custom_call.1} parent=11 // pred_check
          %p103 = pneg %p62
        $region14: #{tpu_custom_call.1} parent=11 // pred_check_branch
          %105 = sbr.rel (%p103) target = $region16
        $region15: #{tpu_custom_call.1} parent=11 // pred_region
          %107 = vsyncadd [#allocation6], 0
          %s109 = sshll.u32 %s1, 4
          %s110 = int_to_ptr.hbm [resolvable:$true] %s109
          %s111 = sshll.u32 [#allocation5], 4
          %s112 = int_to_ptr.vmem [resolvable:$true] %s111
          %114 = dma.hbm_to_vmem [thread:$0]  %s110, 128, %s112, [#allocation6]
        $region16: #{tpu_custom_call.1} parent=11 // pred_fallthru
          _
      $region12: #{tpu_custom_call.1} parent=5 // pred_fallthru
        _
      %p115 = scmp.lt.s32.totalorder %s15, 2
      // Predicated region
      $region17: #{tpu_custom_call.1} parent=5 // pred_check
        %p116 = pneg %p115
      $region18: #{tpu_custom_call.1} parent=5 // pred_check_branch
        %118 = sbr.rel (%p116) target = $region20
      $region19: #{tpu_custom_call.1} parent=5 // pred_region
        // Predicated region
        $region21: #{tpu_custom_call.1} parent=19 // pred_check
          %p119 = pneg %p35
        $region22: #{tpu_custom_call.1} parent=19 // pred_check_branch
          %121 = sbr.rel (%p119) target = $region24
        $region23: #{tpu_custom_call.1} parent=19 // pred_region
          %s122 = sand.u32 %s25, 1
          %s123 = scalar_lea.sflag [#allocation3], %s122
          %s124 = sand.u32 %s25, 1
          %s125 = smul.addr %s124, 8
          %s126 = scalar_lea.vmem [#allocation2], %s125
          %128 = vsyncadd %s123, 0
          %s129 = smul.addr %s15, 8
          %s130 = scalar_lea.hbm %s0, %s129
          %s132 = sshll.u32 %s130, 4
          %s133 = int_to_ptr.hbm [resolvable:$true] %s132
          %s134 = sshll.u32 %s126, 4
          %s135 = int_to_ptr.vmem [resolvable:$true] %s134
          %137 = dma.hbm_to_vmem [thread:$0]  %s133, 128, %s135, %s123
        $region24: #{tpu_custom_call.1} parent=19 // pred_fallthru
          _
      $region20: #{tpu_custom_call.1} parent=5 // pred_fallthru
        _
      %p138 = scmp.le.s32.totalorder 1, %s15
      %p139 = scmp.lt.s32.totalorder %s15, 3
      %p140 = pnand %p138, %p139
      %p141 = pneg %p140
      // Predicated region
      $region25: #{tpu_custom_call.1} parent=5 // pred_check
        _
      $region26: #{tpu_custom_call.1} parent=5 // pred_check_branch
        %143 = sbr.rel (%p140) target = $region28
      $region27: #{tpu_custom_call.1} parent=5 // pred_region
        %s144 = ssub.s32 %s15, 1
        %s145 = sand.u32 %s28, 1
        %s146 = scalar_lea.sflag [#allocation3], %s145
        %s147 = sand.u32 %s28, 1
        %s148 = smul.addr %s147, 8
        %s149 = scalar_lea.vmem [#allocation2], %s148
        // Predicated region
        $region29: #{tpu_custom_call.1} parent=27 // pred_check
          %p150 = pneg %p41
        $region30: #{tpu_custom_call.1} parent=27 // pred_check_branch
          %152 = sbr.rel (%p150) target = $region32
        $region31: #{tpu_custom_call.1} parent=27 // pred_region
          %154 = dma.done %s146, 128
        $region32: #{tpu_custom_call.1} parent=27 // pred_fallthru
          _
        // Predicated region
        $region33: #{tpu_custom_call.1} parent=27 // pred_check
          %p155 = pneg %p62
        $region34: #{tpu_custom_call.1} parent=27 // pred_check_branch
          %157 = sbr.rel (%p155) target = $region36
        $region35: #{tpu_custom_call.1} parent=27 // pred_region
          %159 = dma.done [#allocation6], 128
        $region36: #{tpu_custom_call.1} parent=27 // pred_fallthru
          _
        %s160 = sand.u32 %s28, 1
        %s161 = scalar_lea.sflag [#allocation3], %s160
        %s162 = sand.u32 %s28, 1
        %s163 = smul.addr %s162, 8
        %s164 = scalar_lea.vmem [#allocation2], %s163
        %p165 = pneg %p41
        %p166 = pneg %p38
        %p167 = pneg %p62
        %p168 = pneg %p59
        %p169 = pneg %p88
        %p170 = pneg %p85
        %s171 = sand.u32 %s75, 1
        %s172 = scalar_lea.sflag [#allocation4], %s171
        %s173 = sand.u32 %s75, 1
        %s174 = smul.addr %s173, 8
        %s175 = scalar_lea.vmem [#allocation7], %s174
        %v176 = vld [vmem:[#allocation5] sm:$0xff]
        %v177 = vld [vmem:[%s149] sm:$0xff]
        %v178 = vand.u32 2147483647, %v177
        %vm179 = vcmp.le.f32.partialorder %v178, 0.7853982
        %vm180 = vcmp.lt.s32.totalorder %v177, 0
        %v181 = vand.u32 %v177, 2139095040
        %v182 = vshrl.u32 %v181, 23
        %v183 = vsub.s32 %v182, 127
        %v184 = vand.u32 2147483647, %v177
        %v185 = vand.u32 %v184, 8388607
        %v186 = vor.u32 %v185, 8388608
        %v187 = vsub.s32 0, %v186
        %v188 = vadd.s32 %v183, 1
        %vm189 = vcmp.gt.s32.totalorder %v188, 0
        %v190 = vsel %vm189, %v188, 0
        %v191 = vshrl.u32 %v190, 5
        %v192 = vand.u32 %v190, 31
        %v193 = vsub.s32 32, %v192
        %v194 = vshrl.u32 683565275, %v193
        %v195 = vshll.u32 683565275, %v192
        %v196 = vshrl.u32 2475754826, %v193
        %v197 = vor.u32 %v195, %v196
        %v198 = vshll.u32 2475754826, %v192
        %v199 = vshrl.u32 2131351028, %v193
        %v200 = vor.u32 %v198, %v199
        %v201 = vshll.u32 2131351028, %v192
        %v202 = vshrl.u32 2102212464, %v193
        %v203 = vor.u32 %v201, %v202
        %v204 = vshll.u32 2102212464, %v192
        %v205 = vshrl.u32 920167782, %v193
        %v206 = vor.u32 %v204, %v205
        %v207 = vshll.u32 920167782, %v192
        %v208 = vshrl.u32 1326507024, %v193
        %v209 = vor.u32 %v207, %v208
        %vm210 = vcmp.lt.s32.totalorder %v191, 1
        %vm211 = vcmp.lt.s32.totalorder %v191, 2
        %vm212 = vcmp.lt.s32.totalorder %v191, 3
        %vm213 = vcmp.lt.s32.totalorder %v191, 4
        %v214 = vsel %vm210, %v194, %v197
        %v215 = vsel %vm213, %v203, 2102212464
        %v216 = vsel %vm212, %v200, %v215
        %v217 = vsel %vm211, %v214, %v216
        %v218 = vsel %vm210, %v197, %v200
        %v219 = vsel %vm213, %v206, 920167782
        %v220 = vsel %vm212, %v203, %v219
        %v221 = vsel %vm211, %v218, %v220
        %v222 = vsel %vm210, %v200, %v203
        %v223 = vsel %vm213, %v209, 1326507024
        %v224 = vsel %vm212, %v206, %v223
        %v225 = vsel %vm211, %v222, %v224
        %v226 = vshll.u32 %v186, 8
        %v227 = vand.u32 %v226, 65535
        %v228 = vshrl.u32 %v226, 16
        %v229 = vand.u32 %v225, 65535
        %v230 = vshrl.u32 %v225, 16
        %v231 = vmul.u32 %v227, %v229
        %v232 = vmul.u32 %v227, %v230
        %v233 = vmul.u32 %v228, %v229
        %v234 = vmul.u32 %v228, %v230
        %v235 = vshll.u32 %v232, 16
        %v236 = vshrl.u32 %v232, 16
        %v237 = vshll.u32 %v233, 16
        %v238 = vshrl.u32 %v233, 16
        %vm239 = vc.u32 %v231, %v235
        %v240 = vsel %vm239, 1, 0
        %v241 = vadd.s32 %v231, %v235
        %v242 = vadd.s32 %v234, %v240
        %vm243 = vc.u32 %v241, %v237
        %v244 = vsel %vm243, 1, 0
        %v245 = vadd.s32 %v241, %v237
        %v246 = vadd.s32 %v242, %v244
        %v247 = vadd.s32 %v246, %v236
        %v248 = vadd.s32 %v247, %v238
        %v249 = vand.u32 %v226, 65535
        %v250 = vshrl.u32 %v226, 16
        %v251 = vand.u32 %v221, 65535
        %v252 = vshrl.u32 %v221, 16
        %v253 = vmul.u32 %v249, %v251
        %v254 = vmul.u32 %v249, %v252
        %v255 = vmul.u32 %v250, %v251
        %v256 = vmul.u32 %v250, %v252
        %v257 = vshll.u32 %v254, 16
        %v258 = vshrl.u32 %v254, 16
        %v259 = vshll.u32 %v255, 16
        %v260 = vshrl.u32 %v255, 16
        %vm261 = vc.u32 %v253, %v257
        %v262 = vsel %vm261, 1, 0
        %v263 = vadd.s32 %v253, %v257
        %v264 = vadd.s32 %v256, %v262
        %vm265 = vc.u32 %v263, %v259
        %v266 = vsel %vm265, 1, 0
        %v267 = vadd.s32 %v263, %v259
        %v268 = vadd.s32 %v264, %v266
        %v269 = vadd.s32 %v268, %v258
        %v270 = vadd.s32 %v269, %v260
        %v271 = vmul.u32 %v226, %v217
        %v272 = vadd.s32 %v248, %v267
        %vm273 = vc.u32 %v248, %v267
        %v274 = vadd.s32 %v270, 1
        %v275 = vsel %vm273, %v274, %v270
        %v276 = vadd.s32 %v271, %v275
        %v277 = vadd.s32 %v276, 536870912
        %v278 = vshrl.u32 %v277, 30
        %v279 = vshll.u32 %v278, 30
        %v280 = vsub.s32 %v276, %v279
        %vm281 = vcmp.lt.s32.totalorder %v280, 0
        %v282 = vsub.s32 0, %v280
        %v283 = vsel %vm281, %v282, %v280
        %v284 = vclz %v283
        %v285 = vsub.s32 %v284, 2
        %vm286 = vcmp.gt.s32.totalorder 0, %v285
        %v287 = vsel %vm286, 0, %v285
        %v288 = vsub.s32 32, %v287
        %v289 = vshll.u32 %v280, %v287
        %v290 = vshrl.u32 %v272, %v288
        %v291 = vor.u32 %v289, %v290
        %v292 = vsub.s32 4294967266, %v287
        %v293 = vadd.s32 %v292, 127
        %v294 = vshll.u32 %v293, 23
        %v295 = vor.u32 4788187, %v294
        %v296 = vand.u32 2147483647, %v295
        %v298 = vcvt.s32.f32 %v291
        %v299 = vmul.f32 %v298, %v296
        %v300 = vxor.u32 %v299, 2147483648
        %v301 = vsel %vm180, %v300, %v299
        %v302 = vsub.s32 4, %v278
        %v303 = vsel %vm180, %v302, %v278
        %v304 = vsel %vm179, %v177, %v301
        %v305 = vsel %vm179, 0, %v303
        %v306 = vmul.f32 %v304, %v304
        %v307 = vmul.f32 %v306, -0.001358992
        %v308 = vadd.f32 %v307, 0.041655596
        %v309 = vmul.f32 %v306, %v308
        %v310 = vadd.f32 %v309, -0.4999988
        %v311 = vmul.f32 %v306, %v310
        %v312 = vadd.f32 1.0, %v311
        %v313 = vmul.f32 %v304, %v304
        %v314 = vmul.f32 %v313, -0.00019511016
        %v315 = vadd.f32 %v314, 0.008332121
        %v316 = vmul.f32 %v313, %v315
        %v317 = vadd.f32 %v316, -0.16666654
        %v318 = vmul.f32 %v313, %v317
        %v319 = vadd.f32 %v318, 1.0
        %v320 = vmul.f32 %v319, %v304
        %vm321 = vweird.f32 %v177
        %v322 = vand.u32 %v305, 3
        %vm323 = vcmp.lt.s32.totalorder %v322, 2
        %vm324 = vcmp.eq.s32.totalorder %v322, 0
        %v325 = vxor.u32 %v320, 2147483648
        %v326 = vsel %vm324, %v312, %v325
        %vm327 = vcmp.eq.s32.totalorder %v322, 2
        %v328 = vxor.u32 %v312, 2147483648
        %v329 = vsel %vm327, %v328, %v320
        %v330 = vsel %vm323, %v326, %v329
        %v331 = vsel %vm321, nan, %v330
        %v332 = vand.u32 2147483647, %v177
        %vm333 = vcmp.le.f32.partialorder %v332, 0.7853982
        %vm334 = vcmp.lt.s32.totalorder %v177, 0
        %v335 = vand.u32 %v177, 2139095040
        %v336 = vshrl.u32 %v335, 23
        %v337 = vsub.s32 %v336, 127
        %v338 = vand.u32 2147483647, %v177
        %v339 = vand.u32 %v338, 8388607
        %v340 = vor.u32 %v339, 8388608
        %v341 = vsub.s32 0, %v340
        %v342 = vadd.s32 %v337, 1
        %vm343 = vcmp.gt.s32.totalorder %v342, 0
        %v344 = vsel %vm343, %v342, 0
        %v345 = vshrl.u32 %v344, 5
        %v346 = vand.u32 %v344, 31
        %v347 = vsub.s32 32, %v346
        %v348 = vshrl.u32 683565275, %v347
        %v349 = vshll.u32 683565275, %v346
        %v350 = vshrl.u32 2475754826, %v347
        %v351 = vor.u32 %v349, %v350
        %v352 = vshll.u32 2475754826, %v346
        %v353 = vshrl.u32 2131351028, %v347
        %v354 = vor.u32 %v352, %v353
        %v355 = vshll.u32 2131351028, %v346
        %v356 = vshrl.u32 2102212464, %v347
        %v357 = vor.u32 %v355, %v356
        %v358 = vshll.u32 2102212464, %v346
        %v359 = vshrl.u32 920167782, %v347
        %v360 = vor.u32 %v358, %v359
        %v361 = vshll.u32 920167782, %v346
        %v362 = vshrl.u32 1326507024, %v347
        %v363 = vor.u32 %v361, %v362
        %vm364 = vcmp.lt.s32.totalorder %v345, 1
        %vm365 = vcmp.lt.s32.totalorder %v345, 2
        %vm366 = vcmp.lt.s32.totalorder %v345, 3
        %vm367 = vcmp.lt.s32.totalorder %v345, 4
        %v368 = vsel %vm364, %v348, %v351
        %v369 = vsel %vm367, %v357, 2102212464
        %v370 = vsel %vm366, %v354, %v369
        %v371 = vsel %vm365, %v368, %v370
        %v372 = vsel %vm364, %v351, %v354
        %v373 = vsel %vm367, %v360, 920167782
        %v374 = vsel %vm366, %v357, %v373
        %v375 = vsel %vm365, %v372, %v374
        %v376 = vsel %vm364, %v354, %v357
        %v377 = vsel %vm367, %v363, 1326507024
        %v378 = vsel %vm366, %v360, %v377
        %v379 = vsel %vm365, %v376, %v378
        %v380 = vshll.u32 %v340, 8
        %v381 = vand.u32 %v380, 65535
        %v382 = vshrl.u32 %v380, 16
        %v383 = vand.u32 %v379, 65535
        %v384 = vshrl.u32 %v379, 16
        %v385 = vmul.u32 %v381, %v383
        %v386 = vmul.u32 %v381, %v384
        %v387 = vmul.u32 %v382, %v383
        %v388 = vmul.u32 %v382, %v384
        %v389 = vshll.u32 %v386, 16
        %v390 = vshrl.u32 %v386, 16
        %v391 = vshll.u32 %v387, 16
        %v392 = vshrl.u32 %v387, 16
        %vm393 = vc.u32 %v385, %v389
        %v394 = vsel %vm393, 1, 0
        %v395 = vadd.s32 %v385, %v389
        %v396 = vadd.s32 %v388, %v394
        %vm397 = vc.u32 %v395, %v391
        %v398 = vsel %vm397, 1, 0
        %v399 = vadd.s32 %v395, %v391
        %v400 = vadd.s32 %v396, %v398
        %v401 = vadd.s32 %v400, %v390
        %v402 = vadd.s32 %v401, %v392
        %v403 = vand.u32 %v380, 65535
        %v404 = vshrl.u32 %v380, 16
        %v405 = vand.u32 %v375, 65535
        %v406 = vshrl.u32 %v375, 16
        %v407 = vmul.u32 %v403, %v405
        %v408 = vmul.u32 %v403, %v406
        %v409 = vmul.u32 %v404, %v405
        %v410 = vmul.u32 %v404, %v406
        %v411 = vshll.u32 %v408, 16
        %v412 = vshrl.u32 %v408, 16
        %v413 = vshll.u32 %v409, 16
        %v414 = vshrl.u32 %v409, 16
        %vm415 = vc.u32 %v407, %v411
        %v416 = vsel %vm415, 1, 0
        %v417 = vadd.s32 %v407, %v411
        %v418 = vadd.s32 %v410, %v416
        %vm419 = vc.u32 %v417, %v413
        %v420 = vsel %vm419, 1, 0
        %v421 = vadd.s32 %v417, %v413
        %v422 = vadd.s32 %v418, %v420
        %v423 = vadd.s32 %v422, %v412
        %v424 = vadd.s32 %v423, %v414
        %v425 = vmul.u32 %v380, %v371
        %v426 = vadd.s32 %v402, %v421
        %vm427 = vc.u32 %v402, %v421
        %v428 = vadd.s32 %v424, 1
        %v429 = vsel %vm427, %v428, %v424
        %v430 = vadd.s32 %v425, %v429
        %v431 = vadd.s32 %v430, 536870912
        %v432 = vshrl.u32 %v431, 30
        %v433 = vshll.u32 %v432, 30
        %v434 = vsub.s32 %v430, %v433
        %vm435 = vcmp.lt.s32.totalorder %v434, 0
        %v436 = vsub.s32 0, %v434
        %v437 = vsel %vm435, %v436, %v434
        %v438 = vclz %v437
        %v439 = vsub.s32 %v438, 2
        %vm440 = vcmp.gt.s32.totalorder 0, %v439
        %v441 = vsel %vm440, 0, %v439
        %v442 = vsub.s32 32, %v441
        %v443 = vshll.u32 %v434, %v441
        %v444 = vshrl.u32 %v426, %v442
        %v445 = vor.u32 %v443, %v444
        %v446 = vsub.s32 4294967266, %v441
        %v447 = vadd.s32 %v446, 127
        %v448 = vshll.u32 %v447, 23
        %v449 = vor.u32 4788187, %v448
        %v450 = vand.u32 2147483647, %v449
        %v452 = vcvt.s32.f32 %v445
        %v453 = vmul.f32 %v452, %v450
        %v454 = vxor.u32 %v453, 2147483648
        %v455 = vsel %vm334, %v454, %v453
        %v456 = vsub.s32 4, %v432
        %v457 = vsel %vm334, %v456, %v432
        %v458 = vsel %vm333, %v177, %v455
        %v459 = vsel %vm333, 0, %v457
        %v460 = vmul.f32 %v458, %v458
        %v461 = vmul.f32 %v460, -0.001358992
        %v462 = vadd.f32 %v461, 0.041655596
        %v463 = vmul.f32 %v460, %v462
        %v464 = vadd.f32 %v463, -0.4999988
        %v465 = vmul.f32 %v460, %v464
        %v466 = vadd.f32 1.0, %v465
        %v467 = vmul.f32 %v458, %v458
        %v468 = vmul.f32 %v467, -0.00019511016
        %v469 = vadd.f32 %v468, 0.008332121
        %v470 = vmul.f32 %v467, %v469
        %v471 = vadd.f32 %v470, -0.16666654
        %v472 = vmul.f32 %v467, %v471
        %v473 = vadd.f32 %v472, 1.0
        %v474 = vmul.f32 %v473, %v458
        %vm475 = vweird.f32 %v177
        %v476 = vadd.s32 %v459, 3
        %v477 = vand.u32 %v476, 3
        %vm478 = vcmp.lt.s32.totalorder %v477, 2
        %vm479 = vcmp.eq.s32.totalorder %v477, 0
        %v480 = vxor.u32 %v474, 2147483648
        %v481 = vsel %vm479, %v466, %v480
        %vm482 = vcmp.eq.s32.totalorder %v477, 2
        %v483 = vxor.u32 %v466, 2147483648
        %v484 = vsel %vm482, %v483, %v474
        %v485 = vsel %vm478, %v481, %v484
        %v486 = vsel %vm475, nan, %v485
        %v487 = vperm.slane %v176, 0
        %v488 = vmul.f32 %v331, %v487
        %v489 = vperm.slane %v176, 1
        %v490 = vmul.f32 %v486, %v489
        %v491 = vadd.f32 %v488, %v490
        %v492 = vperm.slane %v176, 2
        %v493 = vadd.f32 %v491, %v492
        %v494 = vperm.slane %v176, 3
        %v495 = vmul.f32 %v331, %v494
        %v496 = vperm.slane %v176, 4
        %v497 = vmul.f32 %v486, %v496
        %v498 = vadd.f32 %v495, %v497
        %vm499 = vcmask 261120
        %v500 = vsel %vm499, %v498, 0.0
        %501 = vadd.xlane.f32.xlu0 %v500
        %v502 = vpop.xlane.xlu0 %501
        %v503 = vperm.slane %v176, 7
        %v504 = vadd.f32 %v502, %v503
        %v505 = vperm.slane %v176, 5
        %v506 = vmul.f32 %v331, %v505
        %v507 = vperm.slane %v176, 6
        %v508 = vmul.f32 %v486, %v507
        %v509 = vadd.f32 %v506, %v508
        %v510 = vsel %vm499, %v509, 0.0
        %511 = vadd.xlane.f32.xlu0 %v510
        %v512 = vpop.xlane.xlu0 %511
        %v513 = vadd.f32 %v512, %v503
        %515 = vrot.lane.b32.xlu0 %v513, 127
        %v516 = vpop.permute.xlu0 %515
        %518 = vxpose.xlu0.b32.start [1/16] %v516, 128
        %519 = vxpose.xlu0.b32.cont [2/16] 0.0, 128
        %520 = vxpose.xlu0.b32.cont [3/16] 0.0, 128
        %521 = vxpose.xlu0.b32.cont [4/16] 0.0, 128
        %522 = vxpose.xlu0.b32.cont [5/16] 0.0, 128
        %523 = vxpose.xlu0.b32.cont [6/16] 0.0, 128
        %524 = vxpose.xlu0.b32.cont [7/16] 0.0, 128
        %525 = vxpose.xlu0.b32.cont [8/16] 0.0, 128
        %526 = vxpose.xlu0.b32.cont [9/16] 0.0, 128
        %527 = vxpose.xlu0.b32.cont [10/16] 0.0, 128
        %528 = vxpose.xlu0.b32.cont [11/16] 0.0, 128
        %529 = vxpose.xlu0.b32.cont [12/16] 0.0, 128
        %530 = vxpose.xlu0.b32.cont [13/16] 0.0, 128
        %531 = vxpose.xlu0.b32.cont [14/16] 0.0, 128
        %532 = vxpose.xlu0.b32.cont [15/16] 0.0, 128
        %533 = vxpose.xlu0.b32.end [16/16] 0.0, 128
        %v534 = vpop.trf.xlu0
        %v535 = vpop.trf.xlu0
        %v536 = vpop.trf.xlu0
        %v537 = vpop.trf.xlu0
        %v538 = vpop.trf.xlu0
        %v539 = vpop.trf.xlu0
        %v540 = vpop.trf.xlu0
        %v541 = vpop.trf.xlu0
        %v542 = vpop.trf.xlu0
        %v543 = vpop.trf.xlu0
        %v544 = vpop.trf.xlu0
        %v545 = vpop.trf.xlu0
        %v546 = vpop.trf.xlu0
        %v547 = vpop.trf.xlu0
        %v548 = vpop.trf.xlu0
        %v549 = vpop.trf.xlu0
        %551 = vset.pattern.permute.xlu0 0
        %552 = vperm.xlu0 %551, %v504
        %v553 = vpop.permute.xlu0 %552
        %v555 = vperm.slane %v534, 0
        %v556 = vsub.f32 %v553, %v555
        %v557 = vmul.f32 %v556, %v556
        %v558 = vsub.f32 0.0, %v557
        %v559 = vmul.f32 %v558, 1.442695
        %v560 = vpow.pop %v559
        %vm561 = vcmask 64512
        %v562 = vsel %vm561, %v560, 0.0
        %563 = vadd.xlane.f32.xlu0 %v562
        %v564 = vpop.xlane.xlu0 %563
        %v565 = vrcp.pop %v564
        %v566 = vmul.f32 %v560, %v565
        %568 = vset.pattern.permute.xlu0 0
        %569 = vperm.xlu0 %568, %v566
        %v570 = vpop.permute.xlu0 %569
        %v572 = vperm.slane %v493, 0
        %v573 = vmul.f32 %v570, %v572
        %574 = vset.pattern.permute.xlu0 1
        %575 = vperm.xlu0 %574, %v566
        %v576 = vpop.permute.xlu0 %575
        %v578 = vperm.slane %v493, 1
        %v579 = vmul.f32 %v576, %v578
        %v580 = vadd.f32 %v573, %v579
        %581 = vset.pattern.permute.xlu0 2
        %582 = vperm.xlu0 %581, %v566
        %v583 = vpop.permute.xlu0 %582
        %v585 = vperm.slane %v493, 2
        %v586 = vmul.f32 %v583, %v585
        %v587 = vadd.f32 %v580, %v586
        %588 = vset.pattern.permute.xlu0 3
        %589 = vperm.xlu0 %588, %v566
        %v590 = vpop.permute.xlu0 %589
        %v592 = vperm.slane %v493, 3
        %v593 = vmul.f32 %v590, %v592
        %v594 = vadd.f32 %v587, %v593
        %595 = vset.pattern.permute.xlu0 4
        %596 = vperm.xlu0 %595, %v566
        %v597 = vpop.permute.xlu0 %596
        %v599 = vperm.slane %v493, 4
        %v600 = vmul.f32 %v597, %v599
        %v601 = vadd.f32 %v594, %v600
        %602 = vset.pattern.permute.xlu0 5
        %603 = vperm.xlu0 %602, %v566
        %v604 = vpop.permute.xlu0 %603
        %v606 = vperm.slane %v493, 5
        %v607 = vmul.f32 %v604, %v606
        %v608 = vadd.f32 %v601, %v607
        %609 = vset.pattern.permute.xlu0 6
        %610 = vperm.xlu0 %609, %v566
        %v611 = vpop.permute.xlu0 %610
        %v613 = vperm.slane %v493, 6
        %v614 = vmul.f32 %v611, %v613
        %v615 = vadd.f32 %v608, %v614
        %616 = vset.pattern.permute.xlu0 7
        %617 = vperm.xlu0 %616, %v566
        %v618 = vpop.permute.xlu0 %617
        %v620 = vperm.slane %v493, 7
        %v621 = vmul.f32 %v618, %v620
        %v622 = vadd.f32 %v615, %v621
        %623 = vst.msk [vmem:[%s175] sm:$0xff] %vm499, %v622
        %s624 = sand.u32 %s75, 1
        %s625 = scalar_lea.sflag [#allocation4], %s624
        %s626 = sand.u32 %s75, 1
        %s627 = smul.addr %s626, 8
        %s628 = scalar_lea.vmem [#allocation7], %s627
        // Predicated region
        $region37: #{tpu_custom_call.1} parent=27 // pred_check
          %p629 = pneg %p85
        $region38: #{tpu_custom_call.1} parent=27 // pred_check_branch
          %631 = sbr.rel (%p629) target = $region40
        $region39: #{tpu_custom_call.1} parent=27 // pred_region
          %633 = vsyncadd %s625, 0
          %s634 = smul.addr %s20, 8
          %s635 = scalar_lea.hbm %s2, %s634
          %s637 = sshll.u32 %s628, 4
          %s638 = int_to_ptr.vmem [resolvable:$true] %s637
          %s639 = sshll.u32 %s635, 4
          %s640 = int_to_ptr.hbm [resolvable:$true] %s639
          %642 = dma.vmem_to_hbm [thread:$0]  %s638, 128, %s640, %s625
        $region40: #{tpu_custom_call.1} parent=27 // pred_fallthru
          _
      $region28: #{tpu_custom_call.1} parent=5 // pred_fallthru
        _
      %p643 = scmp.le.s32.totalorder 2, %s15
      // Predicated region
      $region41: #{tpu_custom_call.1} parent=5 // pred_check
        %p644 = pneg %p643
      $region42: #{tpu_custom_call.1} parent=5 // pred_check_branch
        %646 = sbr.rel (%p644) target = $region44
      $region43: #{tpu_custom_call.1} parent=5 // pred_region
        %s647 = ssub.s32 %s15, 2
        // Predicated region
        $region45: #{tpu_custom_call.1} parent=43 // pred_check
          %p648 = pneg %p91
        $region46: #{tpu_custom_call.1} parent=43 // pred_check_branch
          %650 = sbr.rel (%p648) target = $region48
        $region47: #{tpu_custom_call.1} parent=43 // pred_region
          %s651 = sand.u32 %s76, 1
          %s652 = scalar_lea.sflag [#allocation4], %s651
          %s653 = sand.u32 %s76, 1
          %s654 = smul.addr %s653, 8
          %s655 = scalar_lea.vmem [#allocation7], %s654
          %657 = dma.done %s652, 128
        $region48: #{tpu_custom_call.1} parent=43 // pred_fallthru
          _
      $region44: #{tpu_custom_call.1} parent=5 // pred_fallthru
        _
    $region6: #{tpu_custom_call.1} parent=1 // loop_footer
      %s19 = sadd.s32 1, %s15
    $region7: #{tpu_custom_call.1} parent=1 // loop_footer_branch
      %14 = sbr.rel target = $region3
    $region8: #{tpu_custom_call.1} parent=1 // loop_exit
      _
    %658 = vsyncpa [#allocation3], 1
    %s659 = scalar_lea.sflag [#allocation3], 1
    %660 = vsyncpa %s659, 1
    %661 = vsyncpa [#allocation6], 1
    %662 = vsyncpa [#allocation4], 1
    %s663 = scalar_lea.sflag [#allocation4], 1
    %664 = vsyncpa %s663, 1

</llo_original>
